<compile_context>
chip_gen: v7x
topology: tpu7x:2x2x1
jax: 0.10.0
libtpu: 0.0.40
codegen_flags: <defaults>
</compile_context>

<pallas_src>
import jax
import jax.numpy as jnp
from jax.experimental import pallas as pl
from jax.experimental.pallas import tpu as pltpu


def _cdiv(a, b):
    return -(-a // b)


def _round_up(a, b):
    return _cdiv(a, b) * b


def _gather_packed_kernel(idx_ref, table_ref, o_ref):
    """Exact embedding gather as a one-hot x table MXU matmul.

    idx_ref  : (1, k, T) int32  per-group table indices for this row tile,
                                already offset by group*V_pad (lane-dense layout)
    table_ref: (k*V_pad, C) f32 block-diagonal packed embedding table
                                (single resident VMEM copy)
    o_ref    : (T, C)           lane-dense output tile (C == 128 when packed)
    """
    idx = idx_ref[0]                                   # (k, T) int32
    kv = table_ref.shape[0]
    k, t = idx.shape

    # Transposed one-hot: onehot_t[w, p] = 1 iff packed row p selects table
    # row w.  Each group's offset indices live in a disjoint w-band
    # [g*V_pad, (g+1)*V_pad), so OR-ing the k exact-0/1 compares stays exact.
    # TODO(synk): for very large V (one-hot >> output block) chunk the
    # contraction over V inside the kernel instead of shrinking the row tile.
    iota_w = jax.lax.broadcasted_iota(jnp.int32, (kv, t), 0)
    hit = iota_w == idx[0:1, :]
    for g in range(1, k):                              # k is a small Python int -> unrolled
        hit = jnp.logical_or(hit, iota_w == idx[g:g + 1, :])
    onehot_t = hit.astype(jnp.float32)                 # (kv, T), exact 0/1

    # out[p, c] = sum_w onehot_t[w, p] * table[w, c]   -- exact gather on the MXU.
    out = jax.lax.dot_general(
        onehot_t, table_ref[...],
        dimension_numbers=(((0,), (0,)), ((), ())),
        preferred_element_type=jnp.float32)
    o_ref[...] = out.astype(o_ref.dtype)


def _pick_tile_pack_rows(n_pack_rows, c_pad, kv_pad, k, budget_bytes=24 * 2**20):
    """Largest packed-row tile that fits the VMEM budget.

    Budget counts: double-buffered lane-padded f32 output block, double-
    buffered int32 index block (k sublane-padded to 8), the live (kv_pad, T)
    f32 one-hot, and the resident packed table.  Output block additionally
    capped at ~8 MiB (2-8 MiB target amortizes the ~0.35us grid-step overhead).
    """
    idx_sub = _round_up(max(k, 1), 8)
    per_row = 2 * c_pad * 4 + 2 * idx_sub * 4 + kv_pad * 4
    avail = budget_bytes - kv_pad * c_pad * 4          # minus resident table
    t = max(8, avail // per_row)
    t = min(t, (8 * 2**20) // (c_pad * 4))             # cap output block at ~8 MiB
    n_ceil = _round_up(n_pack_rows, 8)
    t = min(t, n_ceil)                                 # don't pad tiny problems up
    if t >= 128:
        t = (t // 128) * 128
    else:
        t = max(8, (t // 8) * 8)
    return int(t)


def relative_position_embedding(query_residue_index, key_residue_index,
                                emb_weight, bins, *, tile_pack_rows=None,
                                out_dtype=None, min_pallas_rows=4096):
    """JAX/Pallas equivalent of VanillaRelativePositionEmbedding.forward.

    query_residue_index : (B,)   integer residue indices
    key_residue_index   : (B, L) integer residue indices
    emb_weight          : (2*bins+2, D) embedding table
    returns             : (B, L, D)

    Pass out_dtype=jnp.bfloat16 to halve the (dominant) output HBM traffic if
    the consumer accepts bf16; the table and the gather stay f32-exact.
    """
    B, L = key_residue_index.shape
    V, D = emb_weight.shape
    assert query_residue_index.shape == (B,)
    assert V == 2 * bins + 2
    out_dtype = emb_weight.dtype if out_dtype is None else jnp.dtype(out_dtype)

    # Index math in the wrapper (fused by XLA): clamp(key - query) + bins + 1.
    # NOTE: residue indices are cast to int32 before the subtraction; fine for
    # residue-scale values, would overflow for arbitrary 64-bit indices.
    diff = (key_residue_index.astype(jnp.int32)
            - query_residue_index.astype(jnp.int32)[:, None])
    idx = jnp.clip(diff, -bins, bins) + (bins + 1)     # values in [1, 2*bins+1], never 0

    n_rows = B * L
    if n_rows < min_pallas_rows:
        # Small-N bypass: minimum tile + launch overhead dominate tiny inputs.
        return emb_weight[idx].astype(out_dtype)

    # ---- lane-dense packing -------------------------------------------------
    # When D < 128, pack k = 128 // D consecutive rows into one 128-lane output
    # row so every store is an unmasked full-lane vst and the output block
    # carries no 128/D lane-padding tax.
    if D < 128 and 128 % D == 0:
        k = 128 // D
    else:
        k = 1
        # TODO(synk): D < 128 with 128 % D != 0 stays lane-sparse; pad D or
        # fuse the gather into the consumer kernel for full store bandwidth.

    V_pad = _round_up(V, 8)                # sublane-align each table block
    C = k * D                              # packed output width (128 when packed)
    C_pad = max(128, _round_up(C, 128))    # lane-padded width in VMEM

    n_pack = _cdiv(n_rows, k)
    t = (tile_pack_rows if tile_pack_rows is not None
         else _pick_tile_pack_rows(n_pack, C_pad, k * V_pad, k))
    num_tiles = _cdiv(n_pack, t)
    n_pack_pad = num_tiles * t

    # Indices regrouped as (tile, group, packed-row) -- lane-dense along the
    # packed-row axis -- with the per-group table offset g*V_pad baked in.
    # Padded rows use index 0 (a real table row); safe because real indices are
    # always >= 1 and padded output rows are sliced off below.
    idx_flat = idx.reshape(n_rows)
    pad = n_pack_pad * k - n_rows
    if pad:
        idx_flat = jnp.pad(idx_flat, (0, pad))
    group_off = jnp.arange(k, dtype=jnp.int32) * V_pad             # (k,)
    idx_grp = idx_flat.reshape(num_tiles, t, k) + group_off        # (tiles, t, k)
    idx_grp = jnp.transpose(idx_grp, (0, 2, 1))                    # (tiles, k, t)

    # Block-diagonal packed table (k*V_pad, C); one resident VMEM copy.
    w = emb_weight.astype(jnp.float32)
    if V_pad != V:
        w = jnp.pad(w, ((0, V_pad - V), (0, 0)))
    if k == 1:
        table = w
    else:
        table = jnp.zeros((k * V_pad, C), jnp.float32)
        for g in range(k):
            table = table.at[g * V_pad:(g + 1) * V_pad, g * D:(g + 1) * D].set(w)

    cost = pl.CostEstimate(
        flops=2 * n_pack_pad * (k * V_pad) * C,
        transcendentals=0,
        bytes_accessed=(idx_grp.size * 4 + table.size * 4
                        + n_pack_pad * C * out_dtype.itemsize),
    )

    out_packed = pl.pallas_call(
        _gather_packed_kernel,
        out_shape=jax.ShapeDtypeStruct((n_pack_pad, C), out_dtype),
        grid=(num_tiles,),
        in_specs=[
            # Per-tile packed indices (lane-dense: k sublanes x t lanes).
            pl.BlockSpec((1, k, t), lambda i: (i, 0, 0)),
            # Whole packed table resident in VMEM (no per-step re-DMA).
            pl.BlockSpec(memory_space=pltpu.MemorySpace.VMEM),
        ],
        out_specs=pl.BlockSpec((t, C), lambda i: (i, 0)),
        compiler_params=pltpu.CompilerParams(
            # TODO(synk): on v7x verify the single "parallel" axis shards across
            # both TensorCores; if not, switch to pltpu.CORE_PARALLEL.
            dimension_semantics=("parallel",),
            # Tiles are budgeted at ~24 MiB; raise the scoped limit past the
            # 32 MiB default while staying under v7x's 64 MiB physical VMEM.
            vmem_limit_bytes=48 * 1024 * 1024,
        ),
        cost_estimate=cost,
    )(idx_grp, table)

    # (n_pack_pad, k*D) -> (n_pack_pad*k, D) is a free contiguous view.
    out = out_packed.reshape(n_pack_pad * k, D)[:n_rows]
    return out.reshape(B, L, D)


def _reference(query_residue_index, key_residue_index, emb_weight, bins):
    diff = key_residue_index - query_residue_index[:, None]
    diff = jnp.clip(diff, -bins, bins) + bins + 1
    return emb_weight[diff]


if __name__ == "__main__":
    key = jax.random.PRNGKey(0)

    # --- case 1: module demo shapes (D < 128 -> lane-dense 4-way packing) ----
    B, L, bins, D = 2, 8, 4, 32
    V = 2 * bins + 2
    k_w, k_q, k_k, key = jax.random.split(key, 4)
    emb_weight = 0.02 * jax.random.normal(k_w, (V, D), dtype=jnp.float32)
    q_idx = jax.random.randint(k_q, (B,), 0, 64, dtype=jnp.int32)
    kv_idx = jax.random.randint(k_k, (B, L), 0, 64, dtype=jnp.int32)

    out = relative_position_embedding(q_idx, kv_idx, emb_weight, bins,
                                      min_pallas_rows=0)   # force the Pallas path
    out = jax.block_until_ready(out)
    ref = _reference(q_idx, kv_idx, emb_weight, bins)
    assert out.shape == (B, L, D)
    assert jnp.allclose(out, ref, atol=1e-6), "mismatch vs reference (packed path)"

    # --- case 2: D a multiple of 128 (k == 1, natively lane-dense) -----------
    B2, L2, bins2, D2 = 2, 24, 8, 256
    V2 = 2 * bins2 + 2
    k_w2, k_q2, k_k2, key = jax.random.split(key, 4)
    emb_weight2 = 0.02 * jax.random.normal(k_w2, (V2, D2), dtype=jnp.float32)
    q_idx2 = jax.random.randint(k_q2, (B2,), 0, 512, dtype=jnp.int32)
    kv_idx2 = jax.random.randint(k_k2, (B2, L2), 0, 512, dtype=jnp.int32)

    out2 = relative_position_embedding(q_idx2, kv_idx2, emb_weight2, bins2,
                                       min_pallas_rows=0)
    out2 = jax.block_until_ready(out2)
    ref2 = _reference(q_idx2, kv_idx2, emb_weight2, bins2)
    assert out2.shape == (B2, L2, D2)
    assert jnp.allclose(out2, ref2, atol=1e-6), "mismatch vs reference (k=1 path)"

    print("KERNEL_OK")
</pallas_src>

<mosaic_0001>
module attributes {stable_mosaic.version = 11 : i64} {
  func.func @_gather_packed_kernel(%arg0: i32, %arg1: memref<1x4x8xi32, #tpu.memory_space<vmem>>, %arg2: memref<64x128xf32, #tpu.memory_space<vmem>>, %arg3: memref<8x128xf32, #tpu.memory_space<vmem>>) attributes {dimension_semantics = [#tpu.dimension_semantics<parallel>], iteration_bounds = array<i64: 1>, scalar_prefetch = 0 : i64, scratch_operands = 0 : i64, tpu.core_type = #tpu.core_type<tc>, window_params = [{transform_indices = @transform_0, window_bounds = array<i64: 1, 4, 8>}, {pipeline_mode = #tpu.pipeline_mode<synchronous>, transform_indices = @transform_1, window_bounds = array<i64: 64, 128>}, {transform_indices = @transform_2, window_bounds = array<i64: 8, 128>}]} {
    %c0 = arith.constant 0 : index
    %c0_0 = arith.constant 0 : index
    %c0_1 = arith.constant 0 : index
    %0 = vector.load %arg1[%c0, %c0_0, %c0_1] : memref<1x4x8xi32, #tpu.memory_space<vmem>>, vector<1x4x8xi32>
    %1 = vector.shape_cast %0 : vector<1x4x8xi32> to vector<4x8xi32>
    %2 = tpu.iota {dimensions = array<i32: 0>} : vector<64x8xi32>
    %3 = vector.extract_strided_slice %1 {offsets = [0, 0], sizes = [1, 8], strides = [1, 1]} : vector<4x8xi32> to vector<1x8xi32>
    %4 = vector.broadcast %3 : vector<1x8xi32> to vector<64x8xi32>
    %5 = arith.cmpi eq, %2, %4 : vector<64x8xi32>
    %6 = vector.extract_strided_slice %1 {offsets = [1, 0], sizes = [1, 8], strides = [1, 1]} : vector<4x8xi32> to vector<1x8xi32>
    %7 = vector.broadcast %6 : vector<1x8xi32> to vector<64x8xi32>
    %8 = arith.cmpi eq, %2, %7 : vector<64x8xi32>
    %9 = arith.ori %5, %8 : vector<64x8xi1>
    %10 = vector.extract_strided_slice %1 {offsets = [2, 0], sizes = [1, 8], strides = [1, 1]} : vector<4x8xi32> to vector<1x8xi32>
    %11 = vector.broadcast %10 : vector<1x8xi32> to vector<64x8xi32>
    %12 = arith.cmpi eq, %2, %11 : vector<64x8xi32>
    %13 = arith.ori %9, %12 : vector<64x8xi1>
    %14 = vector.extract_strided_slice %1 {offsets = [3, 0], sizes = [1, 8], strides = [1, 1]} : vector<4x8xi32> to vector<1x8xi32>
    %15 = vector.broadcast %14 : vector<1x8xi32> to vector<64x8xi32>
    %16 = arith.cmpi eq, %2, %15 : vector<64x8xi32>
    %17 = arith.ori %13, %16 : vector<64x8xi1>
    %18 = arith.extui %17 : vector<64x8xi1> to vector<64x8xi32>
    %19 = arith.sitofp %18 : vector<64x8xi32> to vector<64x8xf32>
    %c0_2 = arith.constant 0 : index
    %c0_3 = arith.constant 0 : index
    %20 = vector.load %arg2[%c0_2, %c0_3] : memref<64x128xf32, #tpu.memory_space<vmem>>, vector<64x128xf32>
    %cst = arith.constant dense<0.000000e+00> : vector<8x128xf32>
    %21 = tpu.matmul %19, %20, %cst {dimension_numbers = #tpu.dot_dimension_numbers<[0], [0], [1], [1], [0, 1, 1, 1], [], []>} : vector<64x8xf32>, vector<64x128xf32>, vector<8x128xf32> -> vector<8x128xf32>
    %c0_4 = arith.constant 0 : index
    %c0_5 = arith.constant 0 : index
    %22 = vector.load %arg3[%c0_4, %c0_5] : memref<8x128xf32, #tpu.memory_space<vmem>>, vector<8x128xf32>
    tpu.vector_store %arg3[%c0_4, %c0_5], %21 {strides = array<i32>} : memref<8x128xf32, #tpu.memory_space<vmem>>, vector<8x128xf32>,
    return
  }
  func.func @transform_0(%arg0: i32) -> (i32, i32, i32) {
    %c0_i32 = arith.constant 0 : i32
    %c0_i32_0 = arith.constant 0 : i32
    %c0_i32_1 = arith.constant 0 : i32
    return %arg0, %c0_i32, %c0_i32_0 : i32, i32, i32
  }
  func.func @transform_1(%arg0: i32) -> (i32, i32) {
    %c0_i32 = arith.constant 0 : i32
    %c0_i32_0 = arith.constant 0 : i32
    %c0_i32_1 = arith.constant 0 : i32
    return %c0_i32, %c0_i32_0 : i32, i32
  }
  func.func @transform_2(%arg0: i32) -> (i32, i32) {
    %c0_i32 = arith.constant 0 : i32
    %c0_i32_0 = arith.constant 0 : i32
    return %arg0, %c0_i32 : i32, i32
  }
}

</mosaic_0001>

<llo_original>
// kernel: tpu_custom_call.1
$region0: #{tpu_custom_call.1}
  #allocation0 [shape = 'u32[]', space=smem, size = 0x4, offset = 0x4, fixed_abs, tag = 'smem constant byte address 0x4 - core index']
  #allocation1 [shape = 'u32[144,128]{1,0:T(1,128)}', space=vmem, size = 0x12000, scoped, tag = 'internal scratch']
  %s0 = inlined_call_operand.hbm [shape: s32[1,4,8], index: 0, kind: input, shape index: {}]
  %s1 = inlined_call_operand.hbm [shape: f32[64,128], index: 1, kind: input, shape index: {}]
  %s2 = inlined_call_operand.hbm [shape: f32[8,128], index: 2, kind: output, shape index: {}]
  %s3 = sld [smem:[#allocation0]]
  $region26: #{tpu_custom_call.1} parent=0
    _
  %s5 = ssub.s32 1, %s3
  %s6 = scalar_select 0, %s5, %s3
  $region1: #{tpu_custom_call.1} parent=0
    #allocation2 [shape = 'u8[2048]{0}', space=vmem, size = 0x800, scoped, tag = 'input window, operand 0, single buffered']
    #allocation3 [shape = 's32[1]{0}', space=sflag, size = 0x4, scoped, tag = 'scoped memory for tpu_custom_call.1']
    #allocation4 [shape = 's32[1]{0}', space=sflag, size = 0x4, scoped, tag = 'scoped memory for tpu_custom_call.1']
    #allocation5 [shape = 'u8[32768]{0}', space=vmem, size = 0x8000, scoped, tag = 'input window, operand 1, single buffered']
    #allocation6 [shape = 's32[1]{0}', space=sflag, size = 0x4, scoped, tag = 'scoped memory for tpu_custom_call.1']
    #allocation7 [shape = 'u8[4096]{0}', space=vmem, size = 0x1000, scoped, tag = 'output window, operand 0, single buffered']
    %7 = vsyncpa [#allocation3], 0
    %8 = vsyncpa [#allocation6], 0
    %9 = vsyncpa [#allocation4], 0
    // Predicated region
    $region2: #{tpu_custom_call.1} parent=1 // pred_check
      _
    $region3: #{tpu_custom_call.1} parent=1 // pred_check_branch
      %11 = sbr.rel (0) target = $region5
    $region4: #{tpu_custom_call.1} parent=1 // pred_region
      %s13 = ssub.s32 64, 64
      %14 = vsyncadd [#allocation3], %s13
      %s16 = sshll.u32 [#allocation2], 4
      %s17 = int_to_ptr.vmem [resolvable:$true] %s16
      %19 = dma.hbm_to_vmem [thread:$0]  %s0, 64, %s17, [#allocation3]
    $region5: #{tpu_custom_call.1} parent=1 // pred_fallthru
      _
    // Predicated region
    $region6: #{tpu_custom_call.1} parent=1 // pred_check
      _
    $region7: #{tpu_custom_call.1} parent=1 // pred_check_branch
      %21 = sbr.rel (0) target = $region9
    $region8: #{tpu_custom_call.1} parent=1 // pred_region
      %s23 = ssub.s32 1024, 1024
      %24 = vsyncadd [#allocation6], %s23
      %s25 = sshll.u32 [#allocation5], 4
      %s26 = int_to_ptr.vmem [resolvable:$true] %s25
      %31 = dma.hbm_to_vmem [thread:$0]  %s1, 1024, %s26, [#allocation6], 128, 128, 8
    $region9: #{tpu_custom_call.1} parent=1 // pred_fallthru
      _
    // Predicated region
    $region10: #{tpu_custom_call.1} parent=1 // pred_check
      _
    $region11: #{tpu_custom_call.1} parent=1 // pred_check_branch
      %33 = sbr.rel (0) target = $region13
    $region12: #{tpu_custom_call.1} parent=1 // pred_region
      %34 = dma.done [#allocation3], 64
    $region13: #{tpu_custom_call.1} parent=1 // pred_fallthru
      _
    // Predicated region
    $region14: #{tpu_custom_call.1} parent=1 // pred_check
      _
    $region15: #{tpu_custom_call.1} parent=1 // pred_check_branch
      %36 = sbr.rel (0) target = $region17
    $region16: #{tpu_custom_call.1} parent=1 // pred_region
      %37 = dma.done [#allocation6], 1024
    $region17: #{tpu_custom_call.1} parent=1 // pred_fallthru
      _
    %v38 = vld [vmem:[#allocation2] sm:$0xf]
    %v39 = vlaneseq
    %v40 = vshrl.u32 %v39, 7
    %v41 = vadd.s32 %v40, 8
    %v42 = vadd.s32 %v40, 16
    %v43 = vadd.s32 %v40, 24
    %v44 = vadd.s32 %v40, 32
    %v45 = vadd.s32 %v40, 40
    %v46 = vadd.s32 %v40, 48
    %v47 = vadd.s32 %v40, 56
    %v48 = vlaneseq
    %v49 = vshrl.u32 %v48, 7
    %v50 = vsub.s32 0, %v49
    %v51 = vrot.slane %v38, %v50
    %vm52 = vcmp.eq.s32.totalorder %v40, %v51
    %vm53 = vcmp.eq.s32.totalorder %v41, %v51
    %vm54 = vcmp.eq.s32.totalorder %v42, %v51
    %vm55 = vcmp.eq.s32.totalorder %v43, %v51
    %vm56 = vcmp.eq.s32.totalorder %v44, %v51
    %vm57 = vcmp.eq.s32.totalorder %v45, %v51
    %vm58 = vcmp.eq.s32.totalorder %v46, %v51
    %vm59 = vcmp.eq.s32.totalorder %v47, %v51
    %v60 = vlaneseq
    %v61 = vshrl.u32 %v60, 7
    %v62 = vsub.s32 1, %v61
    %v63 = vrot.slane %v38, %v62
    %vm64 = vcmp.eq.s32.totalorder %v40, %v63
    %vm65 = vcmp.eq.s32.totalorder %v41, %v63
    %vm66 = vcmp.eq.s32.totalorder %v42, %v63
    %vm67 = vcmp.eq.s32.totalorder %v43, %v63
    %vm68 = vcmp.eq.s32.totalorder %v44, %v63
    %vm69 = vcmp.eq.s32.totalorder %v45, %v63
    %vm70 = vcmp.eq.s32.totalorder %v46, %v63
    %vm71 = vcmp.eq.s32.totalorder %v47, %v63
    %vm72 = vmor %vm52, %vm64
    %vm73 = vmor %vm53, %vm65
    %vm74 = vmor %vm54, %vm66
    %vm75 = vmor %vm55, %vm67
    %vm76 = vmor %vm56, %vm68
    %vm77 = vmor %vm57, %vm69
    %vm78 = vmor %vm58, %vm70
    %vm79 = vmor %vm59, %vm71
    %v80 = vlaneseq
    %v81 = vshrl.u32 %v80, 7
    %v82 = vsub.s32 2, %v81
    %v83 = vrot.slane %v38, %v82
    %vm84 = vcmp.eq.s32.totalorder %v40, %v83
    %vm85 = vcmp.eq.s32.totalorder %v41, %v83
    %vm86 = vcmp.eq.s32.totalorder %v42, %v83
    %vm87 = vcmp.eq.s32.totalorder %v43, %v83
    %vm88 = vcmp.eq.s32.totalorder %v44, %v83
    %vm89 = vcmp.eq.s32.totalorder %v45, %v83
    %vm90 = vcmp.eq.s32.totalorder %v46, %v83
    %vm91 = vcmp.eq.s32.totalorder %v47, %v83
    %vm92 = vmor %vm72, %vm84
    %vm93 = vmor %vm73, %vm85
    %vm94 = vmor %vm74, %vm86
    %vm95 = vmor %vm75, %vm87
    %vm96 = vmor %vm76, %vm88
    %vm97 = vmor %vm77, %vm89
    %vm98 = vmor %vm78, %vm90
    %vm99 = vmor %vm79, %vm91
    %v100 = vlaneseq
    %v101 = vshrl.u32 %v100, 7
    %v102 = vsub.s32 3, %v101
    %v103 = vrot.slane %v38, %v102
    %vm104 = vcmp.eq.s32.totalorder %v40, %v103
    %vm105 = vcmp.eq.s32.totalorder %v41, %v103
    %vm106 = vcmp.eq.s32.totalorder %v42, %v103
    %vm107 = vcmp.eq.s32.totalorder %v43, %v103
    %vm108 = vcmp.eq.s32.totalorder %v44, %v103
    %vm109 = vcmp.eq.s32.totalorder %v45, %v103
    %vm110 = vcmp.eq.s32.totalorder %v46, %v103
    %vm111 = vcmp.eq.s32.totalorder %v47, %v103
    %vm112 = vmor %vm92, %vm104
    %vm113 = vmor %vm93, %vm105
    %vm114 = vmor %vm94, %vm106
    %vm115 = vmor %vm95, %vm107
    %vm116 = vmor %vm96, %vm108
    %vm117 = vmor %vm97, %vm109
    %vm118 = vmor %vm98, %vm110
    %vm119 = vmor %vm99, %vm111
    %v120 = vsel %vm112, 1, 0
    %v121 = vsel %vm113, 1, 0
    %v122 = vsel %vm114, 1, 0
    %v123 = vsel %vm115, 1, 0
    %v124 = vsel %vm116, 1, 0
    %v125 = vsel %vm117, 1, 0
    %v126 = vsel %vm118, 1, 0
    %v127 = vsel %vm119, 1, 0
    %v128 = vcvt.s32.f32 %v120
    %v129 = vcvt.s32.f32 %v121
    %v130 = vcvt.s32.f32 %v122
    %v131 = vcvt.s32.f32 %v123
    %v132 = vcvt.s32.f32 %v124
    %v133 = vcvt.s32.f32 %v125
    %v134 = vcvt.s32.f32 %v126
    %v135 = vcvt.s32.f32 %v127
    %v136 = vld [vmem:[#allocation5] sm:$0xff]
    %v137 = vld [vmem:[#allocation5 + $0x8] sm:$0xff]
    %v138 = vld [vmem:[#allocation5 + $0x10] sm:$0xff]
    %v139 = vld [vmem:[#allocation5 + $0x18] sm:$0xff]
    %v140 = vld [vmem:[#allocation5 + $0x20] sm:$0xff]
    %v141 = vld [vmem:[#allocation5 + $0x28] sm:$0xff]
    %v142 = vld [vmem:[#allocation5 + $0x30] sm:$0xff]
    %v143 = vld [vmem:[#allocation5 + $0x38] sm:$0xff]
    %144 = vxpose.xlu0.b32.start [1/16] %v128, 128
    %145 = vxpose.xlu0.b32.cont [2/16] %v129, 128
    %146 = vxpose.xlu0.b32.cont [3/16] %v130, 128
    %147 = vxpose.xlu0.b32.cont [4/16] %v131, 128
    %148 = vxpose.xlu0.b32.cont [5/16] %v132, 128
    %149 = vxpose.xlu0.b32.cont [6/16] %v133, 128
    %150 = vxpose.xlu0.b32.cont [7/16] %v134, 128
    %151 = vxpose.xlu0.b32.cont [8/16] %v135, 128
    %152 = vxpose.xlu0.b32.cont [9/16] 0.0, 128
    %153 = vxpose.xlu0.b32.cont [10/16] 0.0, 128
    %154 = vxpose.xlu0.b32.cont [11/16] 0.0, 128
    %155 = vxpose.xlu0.b32.cont [12/16] 0.0, 128
    %156 = vxpose.xlu0.b32.cont [13/16] 0.0, 128
    %157 = vxpose.xlu0.b32.cont [14/16] 0.0, 128
    %158 = vxpose.xlu0.b32.cont [15/16] 0.0, 128
    %159 = vxpose.xlu0.b32.end [16/16] 0.0, 128
    %v160 = vpop.trf.xlu0
    %v161 = vpop.trf.xlu0
    %v162 = vpop.trf.xlu0
    %v163 = vpop.trf.xlu0
    %v164 = vpop.trf.xlu0
    %v165 = vpop.trf.xlu0
    %v166 = vpop.trf.xlu0
    %v167 = vpop.trf.xlu0
    %v168 = vpop.trf.xlu0
    %v169 = vpop.trf.xlu0
    %v170 = vpop.trf.xlu0
    %v171 = vpop.trf.xlu0
    %v172 = vpop.trf.xlu0
    %v173 = vpop.trf.xlu0
    %v174 = vpop.trf.xlu0
    %v175 = vpop.trf.xlu0
    %vm176 = vcmask 523264
    %v178 = vsel %vm176, %v160, 0
    %180 = vmatprep.subr.mxu0 0.0
    %181 = vmatpush1.msra.mxu0 %v136
    %182 = vmatprep.subr.mxu0 0.0
    %183 = vmatpush1.msra.mxu0 %v137
    %184 = vmatprep.subr.mxu0 0.0
    %185 = vmatpush1.msra.mxu0 %v138
    %186 = vmatprep.subr.mxu0 0.0
    %187 = vmatpush1.msra.mxu0 %v139
    %188 = vmatprep.subr.mxu0 0.0
    %189 = vmatpush1.msra.mxu0 %v140
    %190 = vmatprep.subr.mxu0 0.0
    %191 = vmatpush1.msra.mxu0 %v141
    %192 = vmatprep.subr.mxu0 0.0
    %193 = vmatpush1.msra.mxu0 %v142
    %194 = vmatprep.subr.mxu0 0.0
    %195 = vmatpush1.msra.mxu0 %v143
    %196 = vmatprep.subr.mxu0 0.0
    %197 = vmatpush1.msra.mxu0 0.0
    %198 = vmatprep.subr.mxu0 0.0
    %199 = vmatpush1.msra.mxu0 0.0
    %200 = vmatprep.subr.mxu0 0.0
    %201 = vmatpush1.msra.mxu0 0.0
    %202 = vmatprep.subr.mxu0 0.0
    %203 = vmatpush1.msra.mxu0 0.0
    %204 = vmatprep.subr.mxu0 0.0
    %205 = vmatpush1.msra.mxu0 0.0
    %206 = vmatprep.subr.mxu0 0.0
    %207 = vmatpush1.msra.mxu0 0.0
    %208 = vmatprep.subr.mxu0 0.0
    %209 = vmatpush1.msra.mxu0 0.0
    %210 = vmatprep.subr.mxu0 0.0
    %211 = vmatpush1.msra.mxu0 0.0
    %212 = vmatprep.subr.mxu0 0.0
    %213 = vmatpush1.msra.mxu0 0.0
    %214 = vmatprep.subr.mxu0 0.0
    %215 = vmatpush1.msra.mxu0 0.0
    %216 = vmatprep.subr.mxu0 0.0
    %217 = vmatpush1.msra.mxu0 0.0
    %218 = vmatprep.subr.mxu0 0.0
    %219 = vmatpush1.msra.mxu0 0.0
    %220 = vmatprep.subr.mxu0 0.0
    %221 = vmatpush1.msra.mxu0 0.0
    %222 = vmatprep.subr.mxu0 0.0
    %223 = vmatpush1.msra.mxu0 0.0
    %224 = vmatprep.subr.mxu0 0.0
    %225 = vmatpush1.msra.mxu0 0.0
    %226 = vmatprep.subr.mxu0 0.0
    %227 = vmatpush1.msra.mxu0 0.0
    %228 = vmatprep.subr.mxu0 0.0
    %229 = vmatpush1.msra.mxu0 0.0
    %230 = vmatprep.subr.mxu0 0.0
    %231 = vmatpush1.msra.mxu0 0.0
    %232 = vmatprep.subr.mxu0 0.0
    %233 = vmatpush1.msra.mxu0 0.0
    %234 = vmatprep.subr.mxu0 0.0
    %235 = vmatpush1.msra.mxu0 0.0
    %236 = vmatprep.subr.mxu0 0.0
    %237 = vmatpush1.msra.mxu0 0.0
    %238 = vmatprep.subr.mxu0 0.0
    %239 = vmatpush1.msra.mxu0 0.0
    %240 = vmatprep.subr.mxu0 0.0
    %241 = vmatpush1.msra.mxu0 0.0
    %242 = vmatprep.subr.mxu0 0.0
    %243 = vmatpush1.msra.mxu0 0.0
    %244 = vmatprep.mubr.f32.mxu0 0.0
    %245 = vmatmul.mubr.f32.gmra.mrb[0].mxu0 %v178
    %v246 = vpop.f32.mrb[0].mxu0
    %v247 = vadd.f32 0.0, %v246
    %v248 = vpop.f32.mrb[0].mxu0
    %249 = vdwg.mxu0
    %250 = vst [vmem:[#allocation7] sm:$0xff] %v247
    // Predicated region
    $region18: #{tpu_custom_call.1} parent=1 // pred_check
      _
    $region19: #{tpu_custom_call.1} parent=1 // pred_check_branch
      %252 = sbr.rel (0) target = $region21
    $region20: #{tpu_custom_call.1} parent=1 // pred_region
      %s254 = ssub.s32 128, 128
      %255 = vsyncadd [#allocation4], %s254
      %s257 = sshll.u32 [#allocation7], 4
      %s258 = int_to_ptr.vmem [resolvable:$true] %s257
      %260 = dma.vmem_to_hbm [thread:$0]  %s258, 128, %s2, [#allocation4]
    $region21: #{tpu_custom_call.1} parent=1 // pred_fallthru
      _
    // Predicated region
    $region22: #{tpu_custom_call.1} parent=1 // pred_check
      _
    $region23: #{tpu_custom_call.1} parent=1 // pred_check_branch
      %262 = sbr.rel (0) target = $region25
    $region24: #{tpu_custom_call.1} parent=1 // pred_region
      %263 = dma.done [#allocation4], 128
    $region25: #{tpu_custom_call.1} parent=1 // pred_fallthru
      _
    %264 = vsyncpa [#allocation3], 1
    %265 = vsyncpa [#allocation6], 1
    %266 = vsyncpa [#allocation4], 1

</llo_original>
